<compile_context>
chip_gen: v7x
topology: tpu7x:2x2x1
jax: 0.10.0
libtpu: 0.0.40
codegen_flags: <defaults>
</compile_context>

<pallas_src>
import functools

import jax
import jax.numpy as jnp
from jax.experimental import pallas as pl
from jax.experimental.pallas import tpu as pltpu


_CHUNK = 1024              # lanes per inner, vreg-resident sub-chunk (multiple of 128)
_DEFAULT_TILE_B = 16 * 1024  # lanes per grid step (amortizes ~0.35us/step overhead)


def _cdiv(a, b):
    return -(-a // b)


def _round_up(a, b):
    return _cdiv(a, b) * b


def _make_kernel(chunk, n_chunks, tanh_dtype):
    """Kernel for a fixed (chunk, n_chunks) tiling.

    Refs (VMEM unless noted):
      x_ref   : (3, tile)    input, batch on lanes
      w1_ref  : (H, 3)       fc1 weight          b1_ref : (H, 1)
      w2_ref  : (3, H)       fc2 weight          b2_ref : (3, 1)
      q_ref   : (3, 3)       Q = w5 * W34^T W34
      c_ref   : (3, 1)       c = 2 * w5 * W34^T b34
      d_ref   : (1, 1) SMEM  d = w5 * ||b34||^2 + b5
      out_ref : (1, tile)
    """

    def chain(x_ref, w1_ref, b1_ref, w2_ref, b2_ref, q_ref, c_ref, d, out_ref, col0):
        xc = x_ref[:, pl.ds(col0, chunk)]                                   # (3, chunk)
        z1 = jnp.dot(w1_ref[...], xc,
                     preferred_element_type=jnp.float32) + b1_ref[...]      # (H, chunk)
        h = jnp.tanh(z1.astype(tanh_dtype)).astype(jnp.float32)
        z2 = jnp.dot(w2_ref[...], h,
                     preferred_element_type=jnp.float32) + b2_ref[...]      # (3, chunk)
        t = jnp.tanh(z2.astype(tanh_dtype)).astype(jnp.float32)
        # out = t^T Q t + c^T t + d  ==  sum over the 3 sublane rows of t*(Qt+c) + d
        u = jnp.dot(q_ref[...], t,
                    preferred_element_type=jnp.float32) + c_ref[...]        # (3, chunk)
        val = (t[0:1, :] * u[0:1, :] + t[1:2, :] * u[1:2, :]
               + t[2:3, :] * u[2:3, :] + d)                                 # (1, chunk)
        out_ref[:, pl.ds(col0, chunk)] = val

    def kernel(x_ref, w1_ref, b1_ref, w2_ref, b2_ref, q_ref, c_ref, d_ref, out_ref):
        d = d_ref[0, 0]
        if n_chunks == 1:
            chain(x_ref, w1_ref, b1_ref, w2_ref, b2_ref, q_ref, c_ref, d, out_ref, 0)
        else:
            # chunk is a multiple of 128 on this path.
            def body(ci, carry):
                col0 = pl.multiple_of(ci * chunk, 128)
                chain(x_ref, w1_ref, b1_ref, w2_ref, b2_ref, q_ref, c_ref, d,
                      out_ref, col0)
                return carry

            jax.lax.fori_loop(0, n_chunks, body, 0,
                              unroll=True if n_chunks <= 16 else 8)

    return kernel


@functools.partial(jax.jit, static_argnames=("tile_b", "min_grid_steps", "tanh_bf16"))
def sqnet_forward_cols(x_cols, params, tile_b=_DEFAULT_TILE_B, min_grid_steps=8,
                       tanh_bf16=False):
    """Fast path: x_cols has shape (3, B) (batch on the lane axis). Returns (B, 1)."""
    (w1, b1, w2, b2, w3, b3, w4, b4, w5, b5) = params
    if x_cols.ndim != 2 or x_cols.shape[0] != 3:
        raise ValueError("x_cols must have shape (3, B)")
    B = x_cols.shape[1]

    f32 = jnp.float32
    w1f = w1.astype(f32)
    w2f = w2.astype(f32)
    b1c = b1.reshape(-1, 1).astype(f32)
    b2c = b2.reshape(-1, 1).astype(f32)

    # Fold fc3/fc4/||.||^2/fc5 into one quadratic form on t = tanh(fc2(...)):
    #   h = W34 t + b34,  out = w5*||h||^2 + b5 = t^T Q t + c^T t + d   (exact)
    w34 = (w4 @ w3).astype(f32)
    b34 = (w4 @ b3 + b4).astype(f32)
    w5s = w5.reshape(()).astype(f32)
    q = w5s * (w34.T @ w34)                                   # (3, 3), symmetric
    c_col = ((2.0 * w5s) * (w34.T @ b34)).reshape(3, 1)       # (3, 1)
    d_s = (w5s * jnp.dot(b34, b34) + b5.reshape(()).astype(f32)).reshape(1, 1)

    # ---- tile selection (all static) -------------------------------------
    if B <= _CHUNK:
        # Whole batch in one full-extent block: no padding, no raggedness.
        chunk, tile = B, B
    else:
        chunk = _CHUNK
        max_tile = (B // chunk) * chunk                       # largest chunk-multiple <= B
        tile = min(_round_up(max(int(tile_b), chunk), chunk), max_tile)
        if min_grid_steps > 1:
            # Keep several grid steps so both v7x TensorCores get work and the
            # DMA pipeline stays deep.
            tile = min(tile, _round_up(_cdiv(B, int(min_grid_steps)), chunk))
        tile = max(tile, chunk)
    n_chunks = tile // chunk
    grid = (_cdiv(B, tile),)

    kernel = _make_kernel(chunk, n_chunks,
                          jnp.bfloat16 if tanh_bf16 else jnp.float32)

    def resident(a):
        # Tiny array resident in VMEM; constant block index => fetched once,
        # copies skipped on subsequent grid steps.
        return pl.BlockSpec(a.shape, lambda i: (0, 0))

    out = pl.pallas_call(
        kernel,
        out_shape=jax.ShapeDtypeStruct((1, B), jnp.float32),
        grid=grid,
        in_specs=[
            pl.BlockSpec((3, tile), lambda i: (0, i)),        # x, batch tiled on lanes
            resident(w1f), resident(b1c),
            resident(w2f), resident(b2c),
            resident(q), resident(c_col),
            pl.BlockSpec(memory_space=pltpu.MemorySpace.SMEM),  # d scalar
        ],
        out_specs=pl.BlockSpec((1, tile), lambda i: (0, i)),
        compiler_params=pltpu.CompilerParams(
            dimension_semantics=("parallel",),
            # Actual use is a few MiB; 32 MiB is an explicit, generation-safe
            # cap (raises v5e's 16 MiB default, well under v7x's 64 MiB phys).
            vmem_limit_bytes=32 * 1024 * 1024,
        ),
    )(x_cols.astype(f32), w1f, b1c, w2f, b2c, q, c_col, d_s)

    # Module convention is (B, 1); callers that can consume the lane-dense
    # (1, B) row should take `out` before this reshape.
    return out.reshape(B, 1)


def sqnet_forward(x, params, **kwargs):
    """PyTorch-convention entry point: x has shape (B, 3) (or (3,) single sample).

    NOTE: this materializes one (B,3)->(3,B) transpose; performance-critical
    callers should produce the (3, B) layout upstream and call
    sqnet_forward_cols directly.
    """
    x = jnp.asarray(x, jnp.float32)
    if x.ndim == 1:
        return sqnet_forward_cols(x.reshape(1, 3).T, params, **kwargs).reshape(1, 1)
    return sqnet_forward_cols(x.T, params, **kwargs)


# ------------------------------ parameter init ------------------------------
def xavier_normal(key, out_features, in_features):
    std = (2.0 / (in_features + out_features)) ** 0.5
    # PyTorch convention: weight shape (out_features, in_features)
    return std * jax.random.normal(key, (out_features, in_features), dtype=jnp.float32)


def bias_init(key, out_features, in_features):
    # PyTorch nn.Linear default bias init: U(-1/sqrt(fan_in), 1/sqrt(fan_in))
    bound = 1.0 / (in_features ** 0.5)
    return jax.random.uniform(key, (out_features,), dtype=jnp.float32,
                              minval=-bound, maxval=bound)


def make_params(hidden_units=16, seed=0):
    keys = jax.random.split(jax.random.PRNGKey(seed), 10)
    w1 = xavier_normal(keys[0], hidden_units, 3)
    b1 = bias_init(keys[1], hidden_units, 3)
    w2 = xavier_normal(keys[2], 3, hidden_units)
    b2 = bias_init(keys[3], 3, hidden_units)
    w3 = xavier_normal(keys[4], 3, 3)
    b3 = bias_init(keys[5], 3, 3)
    w4 = xavier_normal(keys[6], 3, 3)
    b4 = bias_init(keys[7], 3, 3)
    w5 = xavier_normal(keys[8], 1, 1)
    b5 = bias_init(keys[9], 1, 1)
    return (w1, b1, w2, b2, w3, b3, w4, b4, w5, b5)


def sqnet_reference(x, params):
    """Pure-JAX reference, structured exactly like the PyTorch module."""
    (w1, b1, w2, b2, w3, b3, w4, b4, w5, b5) = params
    h = jnp.tanh(x @ w1.T + b1)
    h = jnp.tanh(h @ w2.T + b2)
    h = h @ w3.T + b3
    h = h @ w4.T + b4
    val = jnp.sum(h * h, axis=-1, keepdims=True)       # (B, 1)
    return val @ w5.T + b5                              # (B, 1)


# TODO(synk): SQNet.jacobian / SQNet.hessian use torch.autograd.functional and are
# not part of the forward pass; they are not implemented here.

if __name__ == "__main__":
    HIDDEN = 16
    params = make_params(hidden_units=HIDDEN, seed=0)

    # 1) Small batch through the PyTorch-layout compatibility wrapper.
    B = 8
    x = jax.random.normal(jax.random.PRNGKey(0), (B, 3), dtype=jnp.float32)
    out = jax.block_until_ready(sqnet_forward(x, params))
    ref = sqnet_reference(x, params)
    assert out.shape == (B, 1)
    assert jnp.allclose(out, ref, atol=1e-4, rtol=1e-4)

    # 2) Odd-sized batch, single full-extent block (no padding, no raggedness),
    #    fed directly in the (3, B) fast-path layout.
    B2 = 777
    xt2 = jax.random.normal(jax.random.PRNGKey(1), (3, B2), dtype=jnp.float32)
    out2 = jax.block_until_ready(sqnet_forward_cols(xt2, params))
    ref2 = sqnet_reference(xt2.T, params)
    assert out2.shape == (B2, 1)
    assert jnp.allclose(out2, ref2, atol=1e-4, rtol=1e-4)

    # 3) Multi-step grid, ragged last block, multi-chunk inner loop.
    B3 = 5000
    xt3 = jax.random.normal(jax.random.PRNGKey(2), (3, B3), dtype=jnp.float32)
    out3 = jax.block_until_ready(
        sqnet_forward_cols(xt3, params, tile_b=2048, min_grid_steps=2))
    ref3 = sqnet_reference(xt3.T, params)
    assert out3.shape == (B3, 1)
    assert jnp.allclose(out3, ref3, atol=1e-4, rtol=1e-4)

    print("KERNEL_OK")
</pallas_src>

<mosaic_0001>
module attributes {stable_mosaic.version = 11 : i64} {
  func.func @kernel(%arg0: i32, %arg1: memref<3x8xf32, #tpu.memory_space<vmem>>, %arg2: memref<16x3xf32, #tpu.memory_space<vmem>>, %arg3: memref<16x1xf32, #tpu.memory_space<vmem>>, %arg4: memref<3x16xf32, #tpu.memory_space<vmem>>, %arg5: memref<3x1xf32, #tpu.memory_space<vmem>>, %arg6: memref<3x3xf32, #tpu.memory_space<vmem>>, %arg7: memref<3x1xf32, #tpu.memory_space<vmem>>, %arg8: memref<1x1xf32, #tpu.memory_space<smem>>, %arg9: memref<1x8xf32, #tpu.memory_space<vmem>>) attributes {dimension_semantics = [#tpu.dimension_semantics<parallel>], iteration_bounds = array<i64: 1>, scalar_prefetch = 0 : i64, scratch_operands = 0 : i64, tpu.core_type = #tpu.core_type<tc>, window_params = [{transform_indices = @transform_0, window_bounds = array<i64: 3, 8>}, {pipeline_mode = #tpu.pipeline_mode<synchronous>, transform_indices = @transform_1, window_bounds = array<i64: 16, 3>}, {pipeline_mode = #tpu.pipeline_mode<synchronous>, transform_indices = @transform_2, window_bounds = array<i64: 16, 1>}, {pipeline_mode = #tpu.pipeline_mode<synchronous>, transform_indices = @transform_3, window_bounds = array<i64: 3, 16>}, {pipeline_mode = #tpu.pipeline_mode<synchronous>, transform_indices = @transform_4, window_bounds = array<i64: 3, 1>}, {pipeline_mode = #tpu.pipeline_mode<synchronous>, transform_indices = @transform_5, window_bounds = array<i64: 3, 3>}, {pipeline_mode = #tpu.pipeline_mode<synchronous>, transform_indices = @transform_6, window_bounds = array<i64: 3, 1>}, {transform_indices = @transform_7, window_bounds = array<i64: 1, 1>}, {transform_indices = @transform_8, window_bounds = array<i64: 1, 8>}]} {
    %c0 = arith.constant 0 : index
    %c0_0 = arith.constant 0 : index
    %0 = memref.load %arg8[%c0, %c0_0] : memref<1x1xf32, #tpu.memory_space<smem>>
    %c0_1 = arith.constant 0 : index
    %c0_2 = arith.constant 0 : index
    %1 = vector.load %arg1[%c0_1, %c0_2] : memref<3x8xf32, #tpu.memory_space<vmem>>, vector<3x8xf32>
    %c0_3 = arith.constant 0 : index
    %c0_4 = arith.constant 0 : index
    %2 = vector.load %arg2[%c0_3, %c0_4] : memref<16x3xf32, #tpu.memory_space<vmem>>, vector<16x3xf32>
    %cst = arith.constant dense<0.000000e+00> : vector<16x8xf32>
    %3 = tpu.matmul %2, %1, %cst {dimension_numbers = #tpu.dot_dimension_numbers<[1], [0], [0], [1], [0, 0, 1, 1], [], []>} : vector<16x3xf32>, vector<3x8xf32>, vector<16x8xf32> -> vector<16x8xf32>
    %c0_5 = arith.constant 0 : index
    %c0_6 = arith.constant 0 : index
    %4 = vector.load %arg3[%c0_5, %c0_6] : memref<16x1xf32, #tpu.memory_space<vmem>>, vector<16x1xf32>
    %5 = vector.broadcast %4 : vector<16x1xf32> to vector<16x8xf32>
    %6 = arith.addf %3, %5 : vector<16x8xf32>
    %7 = math.tanh %6 : vector<16x8xf32>
    %c0_7 = arith.constant 0 : index
    %c0_8 = arith.constant 0 : index
    %8 = vector.load %arg4[%c0_7, %c0_8] : memref<3x16xf32, #tpu.memory_space<vmem>>, vector<3x16xf32>
    %cst_9 = arith.constant dense<0.000000e+00> : vector<3x8xf32>
    %9 = tpu.matmul %8, %7, %cst_9 {dimension_numbers = #tpu.dot_dimension_numbers<[1], [0], [0], [1], [0, 0, 1, 1], [], []>} : vector<3x16xf32>, vector<16x8xf32>, vector<3x8xf32> -> vector<3x8xf32>
    %c0_10 = arith.constant 0 : index
    %c0_11 = arith.constant 0 : index
    %10 = vector.load %arg5[%c0_10, %c0_11] : memref<3x1xf32, #tpu.memory_space<vmem>>, vector<3x1xf32>
    %11 = vector.broadcast %10 : vector<3x1xf32> to vector<3x8xf32>
    %12 = arith.addf %9, %11 : vector<3x8xf32>
    %13 = math.tanh %12 : vector<3x8xf32>
    %c0_12 = arith.constant 0 : index
    %c0_13 = arith.constant 0 : index
    %14 = vector.load %arg6[%c0_12, %c0_13] : memref<3x3xf32, #tpu.memory_space<vmem>>, vector<3x3xf32>
    %cst_14 = arith.constant dense<0.000000e+00> : vector<3x8xf32>
    %15 = tpu.matmul %14, %13, %cst_14 {dimension_numbers = #tpu.dot_dimension_numbers<[1], [0], [0], [1], [0, 0, 1, 1], [], []>} : vector<3x3xf32>, vector<3x8xf32>, vector<3x8xf32> -> vector<3x8xf32>
    %c0_15 = arith.constant 0 : index
    %c0_16 = arith.constant 0 : index
    %16 = vector.load %arg7[%c0_15, %c0_16] : memref<3x1xf32, #tpu.memory_space<vmem>>, vector<3x1xf32>
    %17 = vector.broadcast %16 : vector<3x1xf32> to vector<3x8xf32>
    %18 = arith.addf %15, %17 : vector<3x8xf32>
    %19 = vector.extract_strided_slice %13 {offsets = [0, 0], sizes = [1, 8], strides = [1, 1]} : vector<3x8xf32> to vector<1x8xf32>
    %20 = vector.extract_strided_slice %18 {offsets = [0, 0], sizes = [1, 8], strides = [1, 1]} : vector<3x8xf32> to vector<1x8xf32>
    %21 = arith.mulf %19, %20 : vector<1x8xf32>
    %22 = vector.extract_strided_slice %13 {offsets = [1, 0], sizes = [1, 8], strides = [1, 1]} : vector<3x8xf32> to vector<1x8xf32>
    %23 = vector.extract_strided_slice %18 {offsets = [1, 0], sizes = [1, 8], strides = [1, 1]} : vector<3x8xf32> to vector<1x8xf32>
    %24 = arith.mulf %22, %23 : vector<1x8xf32>
    %25 = arith.addf %21, %24 : vector<1x8xf32>
    %26 = vector.extract_strided_slice %13 {offsets = [2, 0], sizes = [1, 8], strides = [1, 1]} : vector<3x8xf32> to vector<1x8xf32>
    %27 = vector.extract_strided_slice %18 {offsets = [2, 0], sizes = [1, 8], strides = [1, 1]} : vector<3x8xf32> to vector<1x8xf32>
    %28 = arith.mulf %26, %27 : vector<1x8xf32>
    %29 = arith.addf %25, %28 : vector<1x8xf32>
    %30 = vector.broadcast %0 : f32 to vector<1x8xf32>
    %31 = arith.addf %29, %30 : vector<1x8xf32>
    %c0_17 = arith.constant 0 : index
    %c0_18 = arith.constant 0 : index
    %32 = vector.load %arg9[%c0_17, %c0_18] : memref<1x8xf32, #tpu.memory_space<vmem>>, vector<1x8xf32>
    tpu.vector_store %arg9[%c0_17, %c0_18], %31 {strides = array<i32>} : memref<1x8xf32, #tpu.memory_space<vmem>>, vector<1x8xf32>,
    return
  }
  func.func @transform_0(%arg0: i32) -> (i32, i32) {
    %c0_i32 = arith.constant 0 : i32
    %c0_i32_0 = arith.constant 0 : i32
    return %c0_i32, %arg0 : i32, i32
  }
  func.func @transform_1(%arg0: i32) -> (i32, i32) {
    %c0_i32 = arith.constant 0 : i32
    %c0_i32_0 = arith.constant 0 : i32
    %c0_i32_1 = arith.constant 0 : i32
    return %c0_i32, %c0_i32_0 : i32, i32
  }
  func.func @transform_2(%arg0: i32) -> (i32, i32) {
    %c0_i32 = arith.constant 0 : i32
    %c0_i32_0 = arith.constant 0 : i32
    %c0_i32_1 = arith.constant 0 : i32
    return %c0_i32, %c0_i32_0 : i32, i32
  }
  func.func @transform_3(%arg0: i32) -> (i32, i32) {
    %c0_i32 = arith.constant 0 : i32
    %c0_i32_0 = arith.constant 0 : i32
    %c0_i32_1 = arith.constant 0 : i32
    return %c0_i32, %c0_i32_0 : i32, i32
  }
  func.func @transform_4(%arg0: i32) -> (i32, i32) {
    %c0_i32 = arith.constant 0 : i32
    %c0_i32_0 = arith.constant 0 : i32
    %c0_i32_1 = arith.constant 0 : i32
    return %c0_i32, %c0_i32_0 : i32, i32
  }
  func.func @transform_5(%arg0: i32) -> (i32, i32) {
    %c0_i32 = arith.constant 0 : i32
    %c0_i32_0 = arith.constant 0 : i32
    %c0_i32_1 = arith.constant 0 : i32
    return %c0_i32, %c0_i32_0 : i32, i32
  }
  func.func @transform_6(%arg0: i32) -> (i32, i32) {
    %c0_i32 = arith.constant 0 : i32
    %c0_i32_0 = arith.constant 0 : i32
    %c0_i32_1 = arith.constant 0 : i32
    return %c0_i32, %c0_i32_0 : i32, i32
  }
  func.func @transform_7(%arg0: i32) -> (i32, i32) {
    %c0_i32 = arith.constant 0 : i32
    %c0_i32_0 = arith.constant 0 : i32
    %c0_i32_1 = arith.constant 0 : i32
    return %c0_i32, %c0_i32_0 : i32, i32
  }
  func.func @transform_8(%arg0: i32) -> (i32, i32) {
    %c0_i32 = arith.constant 0 : i32
    %c0_i32_0 = arith.constant 0 : i32
    return %c0_i32, %arg0 : i32, i32
  }
}

</mosaic_0001>

<llo_original>
// kernel: sqnet_forward_cols.1
$region0: #{sqnet_forward_cols.1}
  #allocation0 [shape = 'u32[]', space=smem, size = 0x4, offset = 0x4, fixed_abs, tag = 'smem constant byte address 0x4 - core index']
  #allocation1 [shape = 'u32[144,128]{1,0:T(1,128)}', space=vmem, size = 0x12000, scoped, tag = 'internal scratch']
  #allocation2 [shape = 'f32[1,1]{1,0:T(1,128)S(6)}', space=smem, size = 0x200, scoped, tag = 'scoped memory for sqnet_forward_cols.1']
  %s0 = inlined_call_operand.vmem [shape: f32[3,8], index: 0, kind: input, shape index: {}]
  %s1 = inlined_call_operand.vmem [shape: f32[16,3], index: 1, kind: input, shape index: {}]
  %s2 = inlined_call_operand.vmem [shape: f32[16,1], index: 2, kind: input, shape index: {}]
  %s3 = inlined_call_operand.vmem [shape: f32[3,16], index: 3, kind: input, shape index: {}]
  %s4 = inlined_call_operand.vmem [shape: f32[3,1], index: 4, kind: input, shape index: {}]
  %s5 = inlined_call_operand.vmem [shape: f32[3,3], index: 5, kind: input, shape index: {}]
  %s6 = inlined_call_operand.vmem [shape: f32[3,1], index: 6, kind: input, shape index: {}]
  %s7 = inlined_call_operand.<no memory space> [shape: f32[1,1], index: 7, kind: input, shape index: {}]
  %s8 = inlined_call_operand.hbm [shape: f32[1,8], index: 8, kind: output, shape index: {}]
  %s9 = sld [smem:[#allocation0]]
  $region42: #{sqnet_forward_cols.1} parent=0
    _
  %s11 = ssub.s32 1, %s9
  %s12 = scalar_select 0, %s11, %s9
  %13 = sst [smem:[#allocation2]] %s7
  $region1: #{sqnet_forward_cols.1} parent=0
    #allocation3 [shape = 'u8[512]{0}', space=vmem, size = 0x400, scoped, tag = 'output window, operand 0, single buffered']
    #allocation4 [shape = 's32[1]{0}', space=sflag, size = 0x4, scoped, tag = 'scoped memory for sqnet_forward_cols.1']
    %14 = vsyncpa [#allocation4], 0
    // Predicated region
    $region2: #{sqnet_forward_cols.1} parent=1 // pred_check
      _
    $region3: #{sqnet_forward_cols.1} parent=1 // pred_check_branch
      %16 = sbr.rel (0) target = $region5
    $region4: #{sqnet_forward_cols.1} parent=1 // pred_region
      _
    $region5: #{sqnet_forward_cols.1} parent=1 // pred_fallthru
      _
    // Predicated region
    $region6: #{sqnet_forward_cols.1} parent=1 // pred_check
      _
    $region7: #{sqnet_forward_cols.1} parent=1 // pred_check_branch
      %18 = sbr.rel (0) target = $region9
    $region8: #{sqnet_forward_cols.1} parent=1 // pred_region
      _
    $region9: #{sqnet_forward_cols.1} parent=1 // pred_fallthru
      _
    // Predicated region
    $region10: #{sqnet_forward_cols.1} parent=1 // pred_check
      _
    $region11: #{sqnet_forward_cols.1} parent=1 // pred_check_branch
      %20 = sbr.rel (0) target = $region13
    $region12: #{sqnet_forward_cols.1} parent=1 // pred_region
      _
    $region13: #{sqnet_forward_cols.1} parent=1 // pred_fallthru
      _
    // Predicated region
    $region14: #{sqnet_forward_cols.1} parent=1 // pred_check
      _
    $region15: #{sqnet_forward_cols.1} parent=1 // pred_check_branch
      %22 = sbr.rel (0) target = $region17
    $region16: #{sqnet_forward_cols.1} parent=1 // pred_region
      _
    $region17: #{sqnet_forward_cols.1} parent=1 // pred_fallthru
      _
    // Predicated region
    $region18: #{sqnet_forward_cols.1} parent=1 // pred_check
      _
    $region19: #{sqnet_forward_cols.1} parent=1 // pred_check_branch
      %24 = sbr.rel (0) target = $region21
    $region20: #{sqnet_forward_cols.1} parent=1 // pred_region
      _
    $region21: #{sqnet_forward_cols.1} parent=1 // pred_fallthru
      _
    // Predicated region
    $region22: #{sqnet_forward_cols.1} parent=1 // pred_check
      _
    $region23: #{sqnet_forward_cols.1} parent=1 // pred_check_branch
      %26 = sbr.rel (0) target = $region25
    $region24: #{sqnet_forward_cols.1} parent=1 // pred_region
      _
    $region25: #{sqnet_forward_cols.1} parent=1 // pred_fallthru
      _
    // Predicated region
    $region26: #{sqnet_forward_cols.1} parent=1 // pred_check
      _
    $region27: #{sqnet_forward_cols.1} parent=1 // pred_check_branch
      %28 = sbr.rel (0) target = $region29
    $region28: #{sqnet_forward_cols.1} parent=1 // pred_region
      _
    $region29: #{sqnet_forward_cols.1} parent=1 // pred_fallthru
      _
    // Predicated region
    $region30: #{sqnet_forward_cols.1} parent=1 // pred_check
      _
    $region31: #{sqnet_forward_cols.1} parent=1 // pred_check_branch
      %30 = sbr.rel (0) target = $region33
    $region32: #{sqnet_forward_cols.1} parent=1 // pred_region
      _
    $region33: #{sqnet_forward_cols.1} parent=1 // pred_fallthru
      _
    %s31 = sld [smem:[#allocation2]]
    %v32 = vld [vmem:[%s0] sm:$0x7]
    %v33 = vld [vmem:[%s1] sm:$0xff]
    %v34 = vld [vmem:[%s1 + $0x8] sm:$0xff]
    %v35 = vld [vmem:[%s2] sm:$0xff]
    %v36 = vld [vmem:[%s2 + $0x8] sm:$0xff]
    %38 = vset.pattern.permute.xlu0 0
    %39 = vperm.xlu0 %38, %v35
    %v40 = vpop.permute.xlu0 %39
    %43 = vset.pattern.permute.xlu0 0
    %44 = vperm.xlu0 %43, %v36
    %v45 = vpop.permute.xlu0 %44
    %vm47 = vcmask 23552
    %v49 = vsel %vm47, %v33, 0
    %v52 = vsel %vm47, %v34, 0
    %vm54 = vcmask 1042432
    %v56 = vsel %vm54, %v32, 0
    %58 = vmatprep.subr.mxu0 0.0
    %59 = vmatpush1.msra.mxu0 %v56
    %60 = vmatprep.subr.mxu0 0.0
    %61 = vmatpush1.msra.mxu0 0.0
    %62 = vmatprep.subr.mxu0 0.0
    %63 = vmatpush1.msra.mxu0 0.0
    %64 = vmatprep.subr.mxu0 0.0
    %65 = vmatpush1.msra.mxu0 0.0
    %66 = vmatprep.subr.mxu0 0.0
    %67 = vmatpush1.msra.mxu0 0.0
    %68 = vmatprep.subr.mxu0 0.0
    %69 = vmatpush1.msra.mxu0 0.0
    %70 = vmatprep.subr.mxu0 0.0
    %71 = vmatpush1.msra.mxu0 0.0
    %72 = vmatprep.subr.mxu0 0.0
    %73 = vmatpush1.msra.mxu0 0.0
    %74 = vmatprep.subr.mxu0 0.0
    %75 = vmatpush1.msra.mxu0 0.0
    %76 = vmatprep.subr.mxu0 0.0
    %77 = vmatpush1.msra.mxu0 0.0
    %78 = vmatprep.subr.mxu0 0.0
    %79 = vmatpush1.msra.mxu0 0.0
    %80 = vmatprep.subr.mxu0 0.0
    %81 = vmatpush1.msra.mxu0 0.0
    %82 = vmatprep.subr.mxu0 0.0
    %83 = vmatpush1.msra.mxu0 0.0
    %84 = vmatprep.subr.mxu0 0.0
    %85 = vmatpush1.msra.mxu0 0.0
    %86 = vmatprep.subr.mxu0 0.0
    %87 = vmatpush1.msra.mxu0 0.0
    %88 = vmatprep.subr.mxu0 0.0
    %89 = vmatpush1.msra.mxu0 0.0
    %90 = vmatprep.subr.mxu0 0.0
    %91 = vmatpush1.msra.mxu0 0.0
    %92 = vmatprep.subr.mxu0 0.0
    %93 = vmatpush1.msra.mxu0 0.0
    %94 = vmatprep.subr.mxu0 0.0
    %95 = vmatpush1.msra.mxu0 0.0
    %96 = vmatprep.subr.mxu0 0.0
    %97 = vmatpush1.msra.mxu0 0.0
    %98 = vmatprep.subr.mxu0 0.0
    %99 = vmatpush1.msra.mxu0 0.0
    %100 = vmatprep.subr.mxu0 0.0
    %101 = vmatpush1.msra.mxu0 0.0
    %102 = vmatprep.subr.mxu0 0.0
    %103 = vmatpush1.msra.mxu0 0.0
    %104 = vmatprep.subr.mxu0 0.0
    %105 = vmatpush1.msra.mxu0 0.0
    %106 = vmatprep.subr.mxu0 0.0
    %107 = vmatpush1.msra.mxu0 0.0
    %108 = vmatprep.subr.mxu0 0.0
    %109 = vmatpush1.msra.mxu0 0.0
    %110 = vmatprep.subr.mxu0 0.0
    %111 = vmatpush1.msra.mxu0 0.0
    %112 = vmatprep.subr.mxu0 0.0
    %113 = vmatpush1.msra.mxu0 0.0
    %114 = vmatprep.subr.mxu0 0.0
    %115 = vmatpush1.msra.mxu0 0.0
    %116 = vmatprep.subr.mxu0 0.0
    %117 = vmatpush1.msra.mxu0 0.0
    %118 = vmatprep.subr.mxu0 0.0
    %119 = vmatpush1.msra.mxu0 0.0
    %120 = vmatprep.subr.mxu0 0.0
    %121 = vmatpush1.msra.mxu0 0.0
    %122 = vmatprep.mubr.f32.mxu0 0.0
    %123 = vmatmul.mubr.f32.gmra.mrb[0].mxu0 %v49
    %v124 = vpop.f32.mrb[0].mxu0
    %v125 = vadd.f32 %v40, %v124
    %v126 = vpop.f32.mrb[0].mxu0
    %127 = vmatprep.mubr.f32.mxu0 0.0
    %128 = vmatmul.mubr.f32.gmra.mrb[0].mxu0 %v52
    %v129 = vpop.f32.mrb[0].mxu0
    %v130 = vadd.f32 %v45, %v129
    %v131 = vpop.f32.mrb[0].mxu0
    %132 = vdwg.mxu0
    %v133 = vtanh.pop %v125
    %v134 = vtanh.pop %v130
    %v135 = vld [vmem:[%s3] sm:$0x7]
    %v136 = vld [vmem:[%s4] sm:$0x7]
    %138 = vset.pattern.permute.xlu0 0
    %139 = vperm.xlu0 %138, %v136
    %v140 = vpop.permute.xlu0 %139
    %vm142 = vcmask 130048
    %v144 = vsel %vm142, %v135, 0
    %146 = vmatprep.subr.mxu0 0.0
    %147 = vmatpush1.msra.mxu0 %v133
    %148 = vmatprep.subr.mxu0 0.0
    %149 = vmatpush1.msra.mxu0 %v134
    %150 = vmatprep.subr.mxu0 0.0
    %151 = vmatpush1.msra.mxu0 0.0
    %152 = vmatprep.subr.mxu0 0.0
    %153 = vmatpush1.msra.mxu0 0.0
    %154 = vmatprep.subr.mxu0 0.0
    %155 = vmatpush1.msra.mxu0 0.0
    %156 = vmatprep.subr.mxu0 0.0
    %157 = vmatpush1.msra.mxu0 0.0
    %158 = vmatprep.subr.mxu0 0.0
    %159 = vmatpush1.msra.mxu0 0.0
    %160 = vmatprep.subr.mxu0 0.0
    %161 = vmatpush1.msra.mxu0 0.0
    %162 = vmatprep.subr.mxu0 0.0
    %163 = vmatpush1.msra.mxu0 0.0
    %164 = vmatprep.subr.mxu0 0.0
    %165 = vmatpush1.msra.mxu0 0.0
    %166 = vmatprep.subr.mxu0 0.0
    %167 = vmatpush1.msra.mxu0 0.0
    %168 = vmatprep.subr.mxu0 0.0
    %169 = vmatpush1.msra.mxu0 0.0
    %170 = vmatprep.subr.mxu0 0.0
    %171 = vmatpush1.msra.mxu0 0.0
    %172 = vmatprep.subr.mxu0 0.0
    %173 = vmatpush1.msra.mxu0 0.0
    %174 = vmatprep.subr.mxu0 0.0
    %175 = vmatpush1.msra.mxu0 0.0
    %176 = vmatprep.subr.mxu0 0.0
    %177 = vmatpush1.msra.mxu0 0.0
    %178 = vmatprep.subr.mxu0 0.0
    %179 = vmatpush1.msra.mxu0 0.0
    %180 = vmatprep.subr.mxu0 0.0
    %181 = vmatpush1.msra.mxu0 0.0
    %182 = vmatprep.subr.mxu0 0.0
    %183 = vmatpush1.msra.mxu0 0.0
    %184 = vmatprep.subr.mxu0 0.0
    %185 = vmatpush1.msra.mxu0 0.0
    %186 = vmatprep.subr.mxu0 0.0
    %187 = vmatpush1.msra.mxu0 0.0
    %188 = vmatprep.subr.mxu0 0.0
    %189 = vmatpush1.msra.mxu0 0.0
    %190 = vmatprep.subr.mxu0 0.0
    %191 = vmatpush1.msra.mxu0 0.0
    %192 = vmatprep.subr.mxu0 0.0
    %193 = vmatpush1.msra.mxu0 0.0
    %194 = vmatprep.subr.mxu0 0.0
    %195 = vmatpush1.msra.mxu0 0.0
    %196 = vmatprep.subr.mxu0 0.0
    %197 = vmatpush1.msra.mxu0 0.0
    %198 = vmatprep.subr.mxu0 0.0
    %199 = vmatpush1.msra.mxu0 0.0
    %200 = vmatprep.subr.mxu0 0.0
    %201 = vmatpush1.msra.mxu0 0.0
    %202 = vmatprep.subr.mxu0 0.0
    %203 = vmatpush1.msra.mxu0 0.0
    %204 = vmatprep.subr.mxu0 0.0
    %205 = vmatpush1.msra.mxu0 0.0
    %206 = vmatprep.subr.mxu0 0.0
    %207 = vmatpush1.msra.mxu0 0.0
    %208 = vmatprep.subr.mxu0 0.0
    %209 = vmatpush1.msra.mxu0 0.0
    %210 = vmatprep.mubr.f32.mxu0 0.0
    %211 = vmatmul.mubr.f32.gmra.mrb[0].mxu0 %v144
    %v212 = vpop.f32.mrb[0].mxu0
    %v213 = vadd.f32 %v140, %v212
    %v214 = vpop.f32.mrb[0].mxu0
    %215 = vdwg.mxu0
    %v216 = vtanh.pop %v213
    %v217 = vld [vmem:[%s5] sm:$0x7]
    %v218 = vld [vmem:[%s6] sm:$0x7]
    %220 = vset.pattern.permute.xlu0 0
    %221 = vperm.xlu0 %220, %v218
    %v222 = vpop.permute.xlu0 %221
    %v225 = vsel %vm47, %v217, 0
    %v228 = vsel %vm54, %v216, 0
    %230 = vmatprep.subr.mxu0 0.0
    %231 = vmatpush1.msra.mxu0 %v228
    %232 = vmatprep.subr.mxu0 0.0
    %233 = vmatpush1.msra.mxu0 0.0
    %234 = vmatprep.subr.mxu0 0.0
    %235 = vmatpush1.msra.mxu0 0.0
    %236 = vmatprep.subr.mxu0 0.0
    %237 = vmatpush1.msra.mxu0 0.0
    %238 = vmatprep.subr.mxu0 0.0
    %239 = vmatpush1.msra.mxu0 0.0
    %240 = vmatprep.subr.mxu0 0.0
    %241 = vmatpush1.msra.mxu0 0.0
    %242 = vmatprep.subr.mxu0 0.0
    %243 = vmatpush1.msra.mxu0 0.0
    %244 = vmatprep.subr.mxu0 0.0
    %245 = vmatpush1.msra.mxu0 0.0
    %246 = vmatprep.subr.mxu0 0.0
    %247 = vmatpush1.msra.mxu0 0.0
    %248 = vmatprep.subr.mxu0 0.0
    %249 = vmatpush1.msra.mxu0 0.0
    %250 = vmatprep.subr.mxu0 0.0
    %251 = vmatpush1.msra.mxu0 0.0
    %252 = vmatprep.subr.mxu0 0.0
    %253 = vmatpush1.msra.mxu0 0.0
    %254 = vmatprep.subr.mxu0 0.0
    %255 = vmatpush1.msra.mxu0 0.0
    %256 = vmatprep.subr.mxu0 0.0
    %257 = vmatpush1.msra.mxu0 0.0
    %258 = vmatprep.subr.mxu0 0.0
    %259 = vmatpush1.msra.mxu0 0.0
    %260 = vmatprep.subr.mxu0 0.0
    %261 = vmatpush1.msra.mxu0 0.0
    %262 = vmatprep.subr.mxu0 0.0
    %263 = vmatpush1.msra.mxu0 0.0
    %264 = vmatprep.subr.mxu0 0.0
    %265 = vmatpush1.msra.mxu0 0.0
    %266 = vmatprep.subr.mxu0 0.0
    %267 = vmatpush1.msra.mxu0 0.0
    %268 = vmatprep.subr.mxu0 0.0
    %269 = vmatpush1.msra.mxu0 0.0
    %270 = vmatprep.subr.mxu0 0.0
    %271 = vmatpush1.msra.mxu0 0.0
    %272 = vmatprep.subr.mxu0 0.0
    %273 = vmatpush1.msra.mxu0 0.0
    %274 = vmatprep.subr.mxu0 0.0
    %275 = vmatpush1.msra.mxu0 0.0
    %276 = vmatprep.subr.mxu0 0.0
    %277 = vmatpush1.msra.mxu0 0.0
    %278 = vmatprep.subr.mxu0 0.0
    %279 = vmatpush1.msra.mxu0 0.0
    %280 = vmatprep.subr.mxu0 0.0
    %281 = vmatpush1.msra.mxu0 0.0
    %282 = vmatprep.subr.mxu0 0.0
    %283 = vmatpush1.msra.mxu0 0.0
    %284 = vmatprep.subr.mxu0 0.0
    %285 = vmatpush1.msra.mxu0 0.0
    %286 = vmatprep.subr.mxu0 0.0
    %287 = vmatpush1.msra.mxu0 0.0
    %288 = vmatprep.subr.mxu0 0.0
    %289 = vmatpush1.msra.mxu0 0.0
    %290 = vmatprep.subr.mxu0 0.0
    %291 = vmatpush1.msra.mxu0 0.0
    %292 = vmatprep.subr.mxu0 0.0
    %293 = vmatpush1.msra.mxu0 0.0
    %294 = vmatprep.mubr.f32.mxu0 0.0
    %295 = vmatmul.mubr.f32.gmra.mrb[0].mxu0 %v225
    %v296 = vpop.f32.mrb[0].mxu0
    %v297 = vadd.f32 %v222, %v296
    %v298 = vpop.f32.mrb[0].mxu0
    %299 = vdwg.mxu0
    %v300 = vmul.f32 %v216, %v297
    %v302 = vrot.slane %v300, 1
    %v304 = vadd.f32 %v300, %v302
    %v305 = vrot.slane %v300, 2
    %v307 = vadd.f32 %v304, %v305
    %v308 = vstv %s31
    %v309 = vadd.f32 %v307, %v308
    %vm310 = vcmask 57344
    %311 = vst.msk [vmem:[#allocation3] sm:$0x1] %vm310, %v309
    // Predicated region
    $region34: #{sqnet_forward_cols.1} parent=1 // pred_check
      _
    $region35: #{sqnet_forward_cols.1} parent=1 // pred_check_branch
      %313 = sbr.rel (0) target = $region37
    $region36: #{sqnet_forward_cols.1} parent=1 // pred_region
      %s315 = ssub.s32 16, 16
      %316 = vsyncadd [#allocation4], %s315
      %s318 = sshll.u32 [#allocation3], 4
      %s319 = int_to_ptr.vmem [resolvable:$true] %s318
      %321 = dma.vmem_to_hbm [thread:$0]  %s319, 16, %s8, [#allocation4]
    $region37: #{sqnet_forward_cols.1} parent=1 // pred_fallthru
      _
    // Predicated region
    $region38: #{sqnet_forward_cols.1} parent=1 // pred_check
      _
    $region39: #{sqnet_forward_cols.1} parent=1 // pred_check_branch
      %323 = sbr.rel (0) target = $region41
    $region40: #{sqnet_forward_cols.1} parent=1 // pred_region
      %324 = dma.done [#allocation4], 16
    $region41: #{sqnet_forward_cols.1} parent=1 // pred_fallthru
      _
    %325 = vsyncpa [#allocation4], 1

</llo_original>
